<compile_context>
chip_gen: v7x
topology: tpu7x:2x2x1
jax: 0.10.0
libtpu: 0.0.40
codegen_flags: <defaults>
</compile_context>

<pallas_src>
import jax
import jax.numpy as jnp
from jax.experimental import pallas as pl
from jax.experimental.pallas import tpu as pltpu


def ones_model_kernel(params_ref, x_ref, o_ref):
    # params_ref: (2, 2) in SMEM. Row 0 = folded weight (w*zeros),
    #                              row 1 = folded bias  (b*zeros + zero_one).
    # x_ref:      (1, TB) in VMEM  (batch along the 128-lane axis -> lane-dense).
    # o_ref:      (2, TB) in VMEM  (one lane-dense row per output feature).
    x = x_ref[...]                                              # (1, TB)
    o_ref[0:1, :] = x * params_ref[0, 0] + params_ref[1, 0]
    o_ref[1:2, :] = x * params_ref[0, 1] + params_ref[1, 1]


def ones_model_forward(x, weight, bias, zeros_buf, zero_one_buf, *, block_b=512):
    """OnesModel forward: x (B, 1) float32 -> (B, 2) float32."""
    B = x.shape[0]

    # Fold the constant algebra (exact for the module's registered buffers,
    # and algebraically identical for any buffer values):
    #   (x*w + b)*zeros + zero_one == x*(w*zeros) + (b*zeros + zero_one)
    eff_w = weight[:, 0] * zeros_buf                            # (2,)
    eff_b = bias * zeros_buf + zero_one_buf                     # (2,)
    params = jnp.stack([eff_w, eff_b]).astype(jnp.float32)      # (2, 2) -> SMEM

    # Lane-dense layout: batch along lanes. x: (B, 1) -> (1, B).
    xt = x.reshape(1, B).astype(jnp.float32)

    if B <= block_b:
        tb, bp = B, B                         # single block, full-extent last dim
    else:
        assert block_b % 128 == 0, "batch tile must be a multiple of 128 lanes"
        tb = block_b
        bp = pl.cdiv(B, tb) * tb
        if bp != B:                            # pad batch to a whole number of tiles
            xt = jnp.pad(xt, ((0, 0), (0, bp - B)))

    grid = (bp // tb,)

    out_t = pl.pallas_call(
        ones_model_kernel,
        out_shape=jax.ShapeDtypeStruct((2, bp), jnp.float32),
        grid=grid,
        in_specs=[
            pl.BlockSpec(memory_space=pltpu.MemorySpace.SMEM),  # packed params
            pl.BlockSpec((1, tb), lambda i: (0, i)),            # x batch tile
        ],
        out_specs=pl.BlockSpec((2, tb), lambda i: (0, i)),
        compiler_params=pltpu.CompilerParams(
            dimension_semantics=("parallel",),  # shard batch tiles across TCs (v7x)
        ),
    )(params, xt)

    # Strip padding and return to the PyTorch (B, 2) layout (XLA-side plumbing).
    return out_t[:, :B].T


if __name__ == "__main__":
    key = jax.random.PRNGKey(0)
    B = 256
    x = jax.random.normal(key, (B, 1), dtype=jnp.float32)

    # Deterministic "parameters" (Linear(1, 2)) and registered buffers.
    weight = jnp.array([[0.5], [-0.25]], dtype=jnp.float32)     # (out=2, in=1)
    bias = jnp.array([0.1, -0.2], dtype=jnp.float32)            # (2,)
    zeros_buf = jnp.zeros((2,), dtype=jnp.float32)
    zero_one_buf = jnp.array([0.0, 1.0], dtype=jnp.float32)

    # block_b=128 -> grid of 2 batch tiles, exercising the pipelined path.
    out = jax.block_until_ready(
        ones_model_forward(x, weight, bias, zeros_buf, zero_one_buf, block_b=128)
    )

    # Reference in plain JAX (mirrors the PyTorch forward exactly).
    ref = (x @ weight.T + bias) * zeros_buf + zero_one_buf
    assert out.shape == (B, 2)
    assert jnp.allclose(out, ref, atol=1e-6), (out, ref)

    # Extra check: the wrapper folding is algebraic, not hard-coded to the
    # constant zeros/[0,1] buffers — semantics hold for arbitrary buffer values.
    z2 = jnp.array([0.3, -1.5], dtype=jnp.float32)
    zo2 = jnp.array([2.0, 0.5], dtype=jnp.float32)
    out2 = jax.block_until_ready(
        ones_model_forward(x, weight, bias, z2, zo2, block_b=128)
    )
    ref2 = (x @ weight.T + bias) * z2 + zo2
    assert jnp.allclose(out2, ref2, atol=1e-5, rtol=1e-5), (out2, ref2)

    print("KERNEL_OK")
</pallas_src>

<mosaic_0001>
module attributes {stable_mosaic.version = 11 : i64} {
  func.func @ones_model_kernel(%arg0: i32, %arg1: memref<2x2xf32, #tpu.memory_space<smem>>, %arg2: memref<1x128xf32, #tpu.memory_space<vmem>>, %arg3: memref<2x128xf32, #tpu.memory_space<vmem>>) attributes {dimension_semantics = [#tpu.dimension_semantics<parallel>], iteration_bounds = array<i64: 2>, scalar_prefetch = 0 : i64, scratch_operands = 0 : i64, tpu.core_type = #tpu.core_type<tc>, window_params = [{transform_indices = @transform_0, window_bounds = array<i64: 2, 2>}, {transform_indices = @transform_1, window_bounds = array<i64: 1, 128>}, {transform_indices = @transform_2, window_bounds = array<i64: 2, 128>}]} {
    %c0 = arith.constant 0 : index
    %c0_0 = arith.constant 0 : index
    %0 = vector.load %arg2[%c0, %c0_0] : memref<1x128xf32, #tpu.memory_space<vmem>>, vector<1x128xf32>
    %c0_1 = arith.constant 0 : index
    %c0_2 = arith.constant 0 : index
    %1 = memref.load %arg1[%c0_1, %c0_2] : memref<2x2xf32, #tpu.memory_space<smem>>
    %2 = vector.broadcast %1 : f32 to vector<1x128xf32>
    %3 = arith.mulf %0, %2 : vector<1x128xf32>
    %c1 = arith.constant 1 : index
    %c0_3 = arith.constant 0 : index
    %4 = memref.load %arg1[%c1, %c0_3] : memref<2x2xf32, #tpu.memory_space<smem>>
    %5 = vector.broadcast %4 : f32 to vector<1x128xf32>
    %6 = arith.addf %3, %5 : vector<1x128xf32>
    %c0_4 = arith.constant 0 : index
    %c0_5 = arith.constant 0 : index
    %7 = vector.load %arg3[%c0_4, %c0_5] : memref<2x128xf32, #tpu.memory_space<vmem>>, vector<1x128xf32>
    tpu.vector_store %arg3[%c0_4, %c0_5], %6 {strides = array<i32>} : memref<2x128xf32, #tpu.memory_space<vmem>>, vector<1x128xf32>,
    %c0_6 = arith.constant 0 : index
    %c1_7 = arith.constant 1 : index
    %8 = memref.load %arg1[%c0_6, %c1_7] : memref<2x2xf32, #tpu.memory_space<smem>>
    %9 = vector.broadcast %8 : f32 to vector<1x128xf32>
    %10 = arith.mulf %0, %9 : vector<1x128xf32>
    %c1_8 = arith.constant 1 : index
    %c1_9 = arith.constant 1 : index
    %11 = memref.load %arg1[%c1_8, %c1_9] : memref<2x2xf32, #tpu.memory_space<smem>>
    %12 = vector.broadcast %11 : f32 to vector<1x128xf32>
    %13 = arith.addf %10, %12 : vector<1x128xf32>
    %c1_10 = arith.constant 1 : index
    %c0_11 = arith.constant 0 : index
    %14 = vector.load %arg3[%c1_10, %c0_11] : memref<2x128xf32, #tpu.memory_space<vmem>>, vector<1x128xf32>
    tpu.vector_store %arg3[%c1_10, %c0_11], %13 {strides = array<i32>} : memref<2x128xf32, #tpu.memory_space<vmem>>, vector<1x128xf32>,
    return
  }
  func.func @transform_0(%arg0: i32) -> (i32, i32) {
    %c0_i32 = arith.constant 0 : i32
    %c0_i32_0 = arith.constant 0 : i32
    %c0_i32_1 = arith.constant 0 : i32
    return %c0_i32, %c0_i32_0 : i32, i32
  }
  func.func @transform_1(%arg0: i32) -> (i32, i32) {
    %c0_i32 = arith.constant 0 : i32
    %c0_i32_0 = arith.constant 0 : i32
    return %c0_i32, %arg0 : i32, i32
  }
  func.func @transform_2(%arg0: i32) -> (i32, i32) {
    %c0_i32 = arith.constant 0 : i32
    %c0_i32_0 = arith.constant 0 : i32
    return %c0_i32, %arg0 : i32, i32
  }
}

</mosaic_0001>

<llo_original>
// kernel: tpu_custom_call.1
$region0: #{tpu_custom_call.1}
  #allocation0 [shape = 'u32[]', space=smem, size = 0x4, offset = 0x4, fixed_abs, tag = 'smem constant byte address 0x4 - core index']
  #allocation1 [shape = 'u32[144,128]{1,0:T(1,128)}', space=vmem, size = 0x12000, scoped, tag = 'internal scratch']
  %s0 = inlined_call_operand.hbm [shape: f32[2,2], index: 0, kind: input, shape index: {}]
  %s1 = inlined_call_operand.vmem [shape: f32[1,256], index: 1, kind: input, shape index: {}]
  %s2 = inlined_call_operand.hbm [shape: f32[2,256], index: 2, kind: output, shape index: {}]
  %s3 = sld [smem:[#allocation0]]
  $region45: #{tpu_custom_call.1} parent=0
    _
  %s5 = ssub.s32 1, %s3
  %s6 = scalar_select 0, %s5, %s3
  $region1: #{tpu_custom_call.1} parent=0
    #allocation2 [shape = 'u8[1024]{0}', space=smem, size = 0x400, scoped, tag = 'input window, operand 0, single buffered']
    #allocation3 [shape = 's32[2]{0}', space=sflag, size = 0x8, scoped, tag = 'scoped memory for tpu_custom_call.1']
    #allocation4 [shape = 's32[2]{0}', space=sflag, size = 0x8, scoped, tag = 'scoped memory for tpu_custom_call.1']
    #allocation5 [shape = 'u8[2048]{0}', space=vmem, size = 0x800, scoped, tag = 'output window, operand 0']
    %7 = vsyncpa [#allocation4], 0
    %8 = vsyncpa [#allocation3], 0
    %s9 = scalar_lea.sflag [#allocation3], 1
    %10 = vsyncpa %s9, 0
    loop: start=0, step=1, limit=4
    $region2: #{tpu_custom_call.1} parent=1 // loop_pre_header
      _
    $region3: #{tpu_custom_call.1} parent=1 // loop_header
      %s12 = sphi 0, %s16
      %p13 = scmp.ge.s32.totalorder %s12, 4
      %s20 = sphi 0, %s20
      %s22 = sphi 0, %s20
      %s23 = sphi 0, %s22
      %s37 = sphi 0, %s23
      %s43 = sphi 0, %s45
      %s46 = sphi 0, %s43
      %s47 = sphi 0, %s46
      %s63 = sphi 0, %s47
      %s69 = sphi 0, %s71
      %s72 = sphi 0, %s69
      %s73 = sphi 0, %s72
      %s89 = sphi 0, %s73
    $region4: #{tpu_custom_call.1} parent=1 // loop_header_branch
      %15 = sbr.rel (%p13) target = $region8
    $region5: #{tpu_custom_call.1} parent=1 // loop_body
      %s17 = ssub.s32 %s12, 1
      %s18 = ssub.s32 %s12, 2
      %s19 = sadd.s32 %s12, 1
      %s21 = sadd.s32 %s20, 1
      %p24 = scmp.eq.s32.totalorder %s12, 1
      %p25 = scmp.ne.s32.totalorder %s20, %s22
      %p26 = scmp.eq.s32.totalorder %s12, 0
      %p27 = por %p25, %p26
      %p28 = scmp.ne.s32.totalorder %s20, %s22
      %p29 = scmp.eq.s32.totalorder %s17, 1
      %p30 = por %p28, %p29
      %p31 = scmp.ne.s32.totalorder %s22, %s23
      %p32 = scmp.eq.s32.totalorder %s17, 0
      %p33 = por %p31, %p32
      %p34 = scmp.ne.s32.totalorder %s22, %s23
      %p35 = scmp.eq.s32.totalorder %s18, 1
      %p36 = por %p34, %p35
      %p38 = scmp.ne.s32.totalorder %s23, %s37
      %p39 = scmp.eq.s32.totalorder %s18, 0
      %p40 = por %p38, %p39
      %s41 = ssub.s32 %s12, %s19
      %p42 = scmp.eq.s32.totalorder %s41, 0
      %s44 = sadd.s32 %s43, 1
      %s45 = scalar_select %p42, %s43, %s44
      %p48 = pneg %p42
      %p49 = scmp.eq.s32.totalorder %s12, 1
      %p50 = por %p48, %p49
      %p51 = scmp.ne.s32.totalorder %s43, %s46
      %p52 = scmp.eq.s32.totalorder %s12, 0
      %p53 = por %p51, %p52
      %p54 = scmp.ne.s32.totalorder %s43, %s46
      %p55 = scmp.eq.s32.totalorder %s17, 1
      %p56 = por %p54, %p55
      %p57 = scmp.ne.s32.totalorder %s46, %s47
      %p58 = scmp.eq.s32.totalorder %s17, 0
      %p59 = por %p57, %p58
      %p60 = scmp.ne.s32.totalorder %s46, %s47
      %p61 = scmp.eq.s32.totalorder %s18, 1
      %p62 = por %p60, %p61
      %p64 = scmp.ne.s32.totalorder %s47, %s63
      %p65 = scmp.eq.s32.totalorder %s18, 0
      %p66 = por %p64, %p65
      %s67 = ssub.s32 %s12, %s19
      %p68 = scmp.eq.s32.totalorder %s67, 0
      %s70 = sadd.s32 %s69, 1
      %s71 = scalar_select %p68, %s69, %s70
      %p74 = pneg %p68
      %p75 = scmp.eq.s32.totalorder %s12, 1
      %p76 = por %p74, %p75
      %p77 = scmp.ne.s32.totalorder %s69, %s72
      %p78 = scmp.eq.s32.totalorder %s12, 0
      %p79 = por %p77, %p78
      %p80 = scmp.ne.s32.totalorder %s69, %s72
      %p81 = scmp.eq.s32.totalorder %s17, 1
      %p82 = por %p80, %p81
      %p83 = scmp.ne.s32.totalorder %s72, %s73
      %p84 = scmp.eq.s32.totalorder %s17, 0
      %p85 = por %p83, %p84
      %p86 = scmp.ne.s32.totalorder %s72, %s73
      %p87 = scmp.eq.s32.totalorder %s18, 1
      %p88 = por %p86, %p87
      %p90 = scmp.ne.s32.totalorder %s73, %s89
      %p91 = scmp.eq.s32.totalorder %s18, 0
      %p92 = por %p90, %p91
      %p93 = scmp.le.s32.totalorder 1, %s12
      %p94 = scmp.lt.s32.totalorder %s12, 3
      %p95 = pnand %p93, %p94
      %p96 = pneg %p95
      // Predicated region
      $region9: #{tpu_custom_call.1} parent=5 // pred_check
        _
      $region10: #{tpu_custom_call.1} parent=5 // pred_check_branch
        %98 = sbr.rel (%p95) target = $region12
      $region11: #{tpu_custom_call.1} parent=5 // pred_region
        %s99 = ssub.s32 %s12, 1
        // Predicated region
        $region13: #{tpu_custom_call.1} parent=11 // pred_check
          %p100 = pneg %p33
        $region14: #{tpu_custom_call.1} parent=11 // pred_check_branch
          %102 = sbr.rel (%p100) target = $region16
        $region15: #{tpu_custom_call.1} parent=11 // pred_region
          %s104 = ssub.s32 32, 32
          %105 = vsyncadd [#allocation4], %s104
          %108 = dma.hbm_to_smem %s0, 32, [#allocation2], [#allocation4]
        $region16: #{tpu_custom_call.1} parent=11 // pred_fallthru
          _
      $region12: #{tpu_custom_call.1} parent=5 // pred_fallthru
        _
      %p109 = scmp.lt.s32.totalorder %s12, 2
      // Predicated region
      $region17: #{tpu_custom_call.1} parent=5 // pred_check
        %p110 = pneg %p109
      $region18: #{tpu_custom_call.1} parent=5 // pred_check_branch
        %112 = sbr.rel (%p110) target = $region20
      $region19: #{tpu_custom_call.1} parent=5 // pred_region
        // Predicated region
        $region21: #{tpu_custom_call.1} parent=19 // pred_check
          %p113 = pneg %p53
        $region22: #{tpu_custom_call.1} parent=19 // pred_check_branch
          %115 = sbr.rel (%p113) target = $region24
        $region23: #{tpu_custom_call.1} parent=19 // pred_region
          %p116 = scmp.lt.s32.totalorder %s12, 1
          %s117 = scalar_select %p116, %s12, 1
          %s118 = scalar_lea.vmem %s1, %s117
        $region24: #{tpu_custom_call.1} parent=19 // pred_fallthru
          _
      $region20: #{tpu_custom_call.1} parent=5 // pred_fallthru
        _
      %p119 = scmp.le.s32.totalorder 1, %s12
      %p120 = scmp.lt.s32.totalorder %s12, 3
      %p121 = pnand %p119, %p120
      %p122 = pneg %p121
      // Predicated region
      $region25: #{tpu_custom_call.1} parent=5 // pred_check
        _
      $region26: #{tpu_custom_call.1} parent=5 // pred_check_branch
        %124 = sbr.rel (%p121) target = $region28
      $region27: #{tpu_custom_call.1} parent=5 // pred_region
        %s125 = ssub.s32 %s12, 1
        // Predicated region
        $region29: #{tpu_custom_call.1} parent=27 // pred_check
          %p126 = pneg %p33
        $region30: #{tpu_custom_call.1} parent=27 // pred_check_branch
          %128 = sbr.rel (%p126) target = $region32
        $region31: #{tpu_custom_call.1} parent=27 // pred_region
          %129 = dma.done [#allocation4], 32
        $region32: #{tpu_custom_call.1} parent=27 // pred_fallthru
          _
        %130 = sfence
        %p131 = pneg %p33
        %p132 = pneg %p30
        %p133 = scmp.lt.s32.totalorder %s17, 1
        %s134 = scalar_select %p133, %s17, 1
        %s135 = scalar_lea.vmem %s1, %s134
        %p136 = pneg %p59
        %p137 = pneg %p56
        %p138 = pneg %p85
        %p139 = pneg %p82
        %s140 = sand.u32 %s72, 1
        %s141 = scalar_lea.sflag [#allocation3], %s140
        %s142 = sand.u32 %s72, 1
        %s143 = smul.addr %s142, 2
        %s144 = scalar_lea.vmem [#allocation5], %s143
        %p145 = scmp.lt.s32.totalorder %s17, 1
        %s146 = scalar_select %p145, %s17, 1
        %s147 = scalar_lea.vmem %s1, %s146
        %v148 = vld [vmem:[%s147] sm:$0x1]
        %s149 = sld [smem:[#allocation2]]
        %v150 = vstv %s149
        %v151 = vmul.f32 %v148, %v150
        %s152 = sld [smem:[#allocation2 + $0x80]]
        %v153 = vstv %s152
        %v154 = vadd.f32 %v151, %v153
        %155 = vst [vmem:[%s144] sm:$0x1] %v154
        %s156 = sld [smem:[#allocation2 + $0x1]]
        %v157 = vstv %s156
        %v158 = vmul.f32 %v148, %v157
        %s159 = sld [smem:[#allocation2 + $0x81]]
        %v160 = vstv %s159
        %v161 = vadd.f32 %v158, %v160
        %162 = vst [vmem:[%s144 + $0x1] sm:$0x1] %v161
        %s163 = sand.u32 %s72, 1
        %s164 = scalar_lea.sflag [#allocation3], %s163
        %s165 = sand.u32 %s72, 1
        %s166 = smul.addr %s165, 2
        %s167 = scalar_lea.vmem [#allocation5], %s166
        // Predicated region
        $region33: #{tpu_custom_call.1} parent=27 // pred_check
          %p168 = pneg %p82
        $region34: #{tpu_custom_call.1} parent=27 // pred_check_branch
          %170 = sbr.rel (%p168) target = $region36
        $region35: #{tpu_custom_call.1} parent=27 // pred_region
          %s172 = ssub.s32 32, 32
          %173 = vsyncadd %s164, %s172
          %s174 = smul.addr %s17, 32
          %s175 = scalar_lea.hbm %s2, %s174
          %s177 = sshll.u32 %s167, 4
          %s178 = int_to_ptr.vmem [resolvable:$true] %s177
          %180 = dma.vmem_to_hbm [thread:$0]  %s178, 32, %s175, %s164
        $region36: #{tpu_custom_call.1} parent=27 // pred_fallthru
          _
      $region28: #{tpu_custom_call.1} parent=5 // pred_fallthru
        _
      %p181 = scmp.le.s32.totalorder 2, %s12
      // Predicated region
      $region37: #{tpu_custom_call.1} parent=5 // pred_check
        %p182 = pneg %p181
      $region38: #{tpu_custom_call.1} parent=5 // pred_check_branch
        %184 = sbr.rel (%p182) target = $region40
      $region39: #{tpu_custom_call.1} parent=5 // pred_region
        %s185 = ssub.s32 %s12, 2
        // Predicated region
        $region41: #{tpu_custom_call.1} parent=39 // pred_check
          %p186 = pneg %p88
        $region42: #{tpu_custom_call.1} parent=39 // pred_check_branch
          %188 = sbr.rel (%p186) target = $region44
        $region43: #{tpu_custom_call.1} parent=39 // pred_region
          %s189 = sand.u32 %s73, 1
          %s190 = scalar_lea.sflag [#allocation3], %s189
          %s191 = sand.u32 %s73, 1
          %s192 = smul.addr %s191, 2
          %s193 = scalar_lea.vmem [#allocation5], %s192
          %194 = dma.done %s190, 32
        $region44: #{tpu_custom_call.1} parent=39 // pred_fallthru
          _
      $region40: #{tpu_custom_call.1} parent=5 // pred_fallthru
        _
    $region6: #{tpu_custom_call.1} parent=1 // loop_footer
      %s16 = sadd.s32 1, %s12
    $region7: #{tpu_custom_call.1} parent=1 // loop_footer_branch
      %11 = sbr.rel target = $region3
    $region8: #{tpu_custom_call.1} parent=1 // loop_exit
      _
    %195 = vsyncpa [#allocation3], 1
    %s196 = scalar_lea.sflag [#allocation3], 1
    %197 = vsyncpa %s196, 1
    %198 = vsyncpa [#allocation4], 1
    %s199 = scalar_lea.sflag [#allocation4], 1
    %200 = vsyncpa %s199, 1

</llo_original>
